<compile_context>
chip_gen: v7x
topology: tpu7x:2x2x1
jax: 0.10.0
libtpu: 0.0.40
codegen_flags: <defaults>
</compile_context>

<pallas_src>
import math

import numpy as np

import jax
import jax.numpy as jnp
from jax.experimental import pallas as pl
from jax.experimental.pallas import tpu as pltpu


def make_feature_transform(n_sin: int, sigma: float, *,
                           out_dtype=jnp.float32,
                           max_tile_n: int = 2048,
                           vmem_budget_bytes: int = 16 * 1024 * 1024):
    """Build a Pallas-TPU implementation of PyTorch `feature_transform`."""
    # Frequencies are compile-time constants (module hyperparameters).
    freqs = np.asarray(
        [2.0 * math.pi * (sigma ** (i / n_sin)) for i in range(1, n_sin + 1)],
        dtype=np.float32)

    def feature_transform(x: jax.Array) -> jax.Array:
        assert x.ndim == 2, "expected (N, D) input"
        n, d = x.shape
        wide = n_sin * d                       # width of the sin (and cos) slab
        out_d = (2 * n_sin + 1) * d
        in_bytes = jnp.dtype(x.dtype).itemsize
        out_bytes = jnp.dtype(out_dtype).itemsize

        # Frequency row: freq j repeated across its D-block -> (1, n_sin*D).
        # Passed as a tiny resident input (same block every grid step) rather than a
        # dense in-kernel constant.
        freq_row = jnp.asarray(np.repeat(freqs, d)[None, :], dtype=jnp.float32)

        # Sublane alignment follows the OUTPUT dtype packing (f32:8, bf16:16, 1B:32).
        sub = {4: 8, 2: 16, 1: 32}.get(out_bytes, 8)

        # Per-row VMEM: double-buffered input + output tiles, plus the f32 compute
        # intermediates (x_f32, z_wide, sin, cos ~ (1 + 3*n_sin) * D f32 per row).
        per_row = (2 * (d * in_bytes + out_d * out_bytes)
                   + (1 + 3 * n_sin) * d * 4)
        tile_n = min(max_tile_n, max(sub, vmem_budget_bytes // max(per_row, 1)))

        # v7x megacore: keep the "parallel" row grid at >= 2 steps when feasible.
        if n > 2 * sub:
            half = ((pl.cdiv(n, 2) + sub - 1) // sub) * sub
            tile_n = min(tile_n, half)

        if tile_n >= n:
            tile_n = n                          # single block == full array extent
        else:
            tile_n = max(sub, (tile_n // sub) * sub)
        num_tiles = pl.cdiv(n, tile_n)

        # Only raise the scoped VMEM limit if the working set actually needs it;
        # cap at 48 MiB so v7x (64 MiB physical) keeps headroom.
        working_set = tile_n * per_row + 2 * wide * 4
        vmem_limit = None
        if working_set > 16 * 1024 * 1024:
            vmem_limit = min(int(working_set * 1.25) + (1 << 20), 48 * 1024 * 1024)

        # Advisory cost: z multiply + ~16 VPU ops per sin/cos polynomial (incl. range
        # reduction), 2*n_sin transcendentals per element, 1 in + (2*n_sin+1) out HBM.
        poly_ops = 16
        cost = pl.CostEstimate(
            flops=n * d * n_sin * (1 + 2 * poly_ops),
            transcendentals=2 * n_sin * n * d,
            bytes_accessed=n * d * in_bytes + n * out_d * out_bytes,
        )

        def kernel(freq_ref, x_ref, o_ref):
            x = x_ref[...]
            xf = x.astype(jnp.float32)          # in-register cast (VPU), no HBM pass
            # One wide, lane-dense argument per tile: (tile_n, n_sin*D).
            z = jnp.tile(xf, (1, n_sin)) * freq_ref[...]
            # Two wide stores instead of 2*n_sin masked D-wide stores.
            o_ref[:, :wide] = jnp.sin(z).astype(o_ref.dtype)
            o_ref[:, wide:2 * wide] = jnp.cos(z).astype(o_ref.dtype)
            # Trailing identity copy of the raw features (skip redundant cast).
            if x.dtype == o_ref.dtype:
                o_ref[:, 2 * wide:] = x
            else:
                o_ref[:, 2 * wide:] = xf.astype(o_ref.dtype)

        return pl.pallas_call(
            kernel,
            out_shape=jax.ShapeDtypeStruct((n, out_d), out_dtype),
            grid=(num_tiles,),
            in_specs=[
                pl.BlockSpec((1, wide), lambda i: (0, 0)),       # freq row (resident)
                pl.BlockSpec((tile_n, d), lambda i: (i, 0)),     # row tile of features
            ],
            out_specs=pl.BlockSpec((tile_n, out_d), lambda i: (i, 0)),
            compiler_params=pltpu.CompilerParams(
                dimension_semantics=("parallel",),   # rows independent -> megacore
                vmem_limit_bytes=vmem_limit,
            ),
            cost_estimate=cost,
        )(freq_row, x)

    return feature_transform


def feature_transform_ref(x, n_sin, sigma):
    # Pure-JAX reference mirroring the PyTorch code, for verification.
    x = x.astype(jnp.float32)
    parts_sin, parts_cos = [], []
    for i in range(1, n_sin + 1):
        f = 2.0 * math.pi * (sigma ** (i / n_sin))
        parts_sin.append(jnp.sin(x * f))
        parts_cos.append(jnp.cos(x * f))
    return jnp.concatenate(parts_sin + parts_cos + [x], axis=-1)


if __name__ == "__main__":
    n_sin = 4
    sigma = 6.0
    key = jax.random.PRNGKey(0)

    # Small single-block case, consistent with the module's (N, D) forward.
    N, D = 8, 16
    x_small = jax.random.normal(key, (N, D), dtype=jnp.float32)
    ft = make_feature_transform(n_sin, sigma)
    out_small = jax.block_until_ready(ft(x_small))
    ref_small = feature_transform_ref(x_small, n_sin, sigma)
    assert out_small.shape == (N, (2 * n_sin + 1) * D), out_small.shape
    assert jnp.allclose(out_small, ref_small, atol=1e-5, rtol=1e-5), "mismatch (small)"

    # Tiled / pipelined path: force a small row tile so the grid (including a partial
    # boundary block) is exercised and verified against the reference.
    N2 = 200
    x_big = jax.random.normal(jax.random.PRNGKey(0), (N2, D), dtype=jnp.float32)
    ft_tiled = make_feature_transform(n_sin, sigma, max_tile_n=64)
    out_big = jax.block_until_ready(ft_tiled(x_big))
    ref_big = feature_transform_ref(x_big, n_sin, sigma)
    assert out_big.shape == (N2, (2 * n_sin + 1) * D), out_big.shape
    assert jnp.allclose(out_big, ref_big, atol=1e-5, rtol=1e-5), "mismatch (tiled)"

    # Optional bf16-output path (writeback-bound v5e/v6e): smoke-check numerics.
    N3 = 32
    x_bf = jax.random.normal(jax.random.PRNGKey(1), (N3, D), dtype=jnp.float32)
    ft_bf16 = make_feature_transform(n_sin, sigma, out_dtype=jnp.bfloat16)
    out_bf = jax.block_until_ready(ft_bf16(x_bf))
    ref_bf = feature_transform_ref(x_bf, n_sin, sigma)
    assert out_bf.shape == (N3, (2 * n_sin + 1) * D), out_bf.shape
    assert jnp.allclose(out_bf.astype(jnp.float32), ref_bf, atol=5e-2, rtol=5e-2), \
        "mismatch (bf16)"

    print("KERNEL_OK")
</pallas_src>

<mosaic_0001>
module attributes {stable_mosaic.version = 11 : i64} {
  func.func @kernel(%arg0: i32, %arg1: memref<1x64xf32, #tpu.memory_space<vmem>>, %arg2: memref<8x16xf32, #tpu.memory_space<vmem>>, %arg3: memref<8x144xf32, #tpu.memory_space<vmem>>) attributes {dimension_semantics = [#tpu.dimension_semantics<parallel>], iteration_bounds = array<i64: 1>, scalar_prefetch = 0 : i64, scratch_operands = 0 : i64, tpu.core_type = #tpu.core_type<tc>, window_params = [{pipeline_mode = #tpu.pipeline_mode<synchronous>, transform_indices = @transform_0, window_bounds = array<i64: 1, 64>}, {transform_indices = @transform_1, window_bounds = array<i64: 8, 16>}, {transform_indices = @transform_2, window_bounds = array<i64: 8, 144>}]} {
    %c0 = arith.constant 0 : index
    %c0_0 = arith.constant 0 : index
    %0 = vector.load %arg2[%c0, %c0_0] : memref<8x16xf32, #tpu.memory_space<vmem>>, vector<8x16xf32>
    %1 = tpu.concatenate %0, %0, %0, %0 in 1 : vector<8x16xf32>, vector<8x16xf32>, vector<8x16xf32>, vector<8x16xf32> -> vector<8x64xf32>
    %c0_1 = arith.constant 0 : index
    %c0_2 = arith.constant 0 : index
    %2 = vector.load %arg1[%c0_1, %c0_2] : memref<1x64xf32, #tpu.memory_space<vmem>>, vector<1x64xf32>
    %3 = vector.broadcast %2 : vector<1x64xf32> to vector<8x64xf32>
    %4 = arith.mulf %1, %3 : vector<8x64xf32>
    %5 = math.sin %4 : vector<8x64xf32>
    %c0_3 = arith.constant 0 : index
    %c0_4 = arith.constant 0 : index
    %6 = vector.load %arg3[%c0_3, %c0_4] : memref<8x144xf32, #tpu.memory_space<vmem>>, vector<8x64xf32>
    tpu.vector_store %arg3[%c0_3, %c0_4], %5 {strides = array<i32>} : memref<8x144xf32, #tpu.memory_space<vmem>>, vector<8x64xf32>,
    %7 = math.cos %4 : vector<8x64xf32>
    %c0_5 = arith.constant 0 : index
    %c64 = arith.constant 64 : index
    %8 = vector.load %arg3[%c0_5, %c64] : memref<8x144xf32, #tpu.memory_space<vmem>>, vector<8x64xf32>
    tpu.vector_store %arg3[%c0_5, %c64], %7 {strides = array<i32>} : memref<8x144xf32, #tpu.memory_space<vmem>>, vector<8x64xf32>,
    %c0_6 = arith.constant 0 : index
    %c128 = arith.constant 128 : index
    %9 = vector.load %arg3[%c0_6, %c128] : memref<8x144xf32, #tpu.memory_space<vmem>>, vector<8x16xf32>
    tpu.vector_store %arg3[%c0_6, %c128], %0 {strides = array<i32>} : memref<8x144xf32, #tpu.memory_space<vmem>>, vector<8x16xf32>,
    return
  }
  func.func @transform_0(%arg0: i32) -> (i32, i32) {
    %c0_i32 = arith.constant 0 : i32
    %c0_i32_0 = arith.constant 0 : i32
    %c0_i32_1 = arith.constant 0 : i32
    return %c0_i32, %c0_i32_0 : i32, i32
  }
  func.func @transform_1(%arg0: i32) -> (i32, i32) {
    %c0_i32 = arith.constant 0 : i32
    %c0_i32_0 = arith.constant 0 : i32
    return %arg0, %c0_i32 : i32, i32
  }
  func.func @transform_2(%arg0: i32) -> (i32, i32) {
    %c0_i32 = arith.constant 0 : i32
    %c0_i32_0 = arith.constant 0 : i32
    return %arg0, %c0_i32 : i32, i32
  }
}

</mosaic_0001>

<llo_original>
// kernel: tpu_custom_call.1
$region0: #{tpu_custom_call.1}
  #allocation0 [shape = 'u32[]', space=smem, size = 0x4, offset = 0x4, fixed_abs, tag = 'smem constant byte address 0x4 - core index']
  #allocation1 [shape = 'u32[144,128]{1,0:T(1,128)}', space=vmem, size = 0x12000, scoped, tag = 'internal scratch']
  %s0 = inlined_call_operand.hbm [shape: f32[1,64], index: 0, kind: input, shape index: {}]
  %s1 = inlined_call_operand.hbm [shape: f32[8,16], index: 1, kind: input, shape index: {}]
  %s2 = inlined_call_operand.hbm [shape: f32[8,144], index: 2, kind: output, shape index: {}]
  %s3 = sld [smem:[#allocation0]]
  $region26: #{tpu_custom_call.1} parent=0
    _
  %s5 = ssub.s32 1, %s3
  %s6 = scalar_select 0, %s5, %s3
  $region1: #{tpu_custom_call.1} parent=0
    #allocation2 [shape = 'u8[512]{0}', space=vmem, size = 0x400, scoped, tag = 'input window, operand 0, single buffered']
    #allocation3 [shape = 's32[1]{0}', space=sflag, size = 0x4, scoped, tag = 'scoped memory for tpu_custom_call.1']
    #allocation4 [shape = 's32[1]{0}', space=sflag, size = 0x4, scoped, tag = 'scoped memory for tpu_custom_call.1']
    #allocation5 [shape = 'u8[4096]{0}', space=vmem, size = 0x1000, scoped, tag = 'input window, operand 1, single buffered']
    #allocation6 [shape = 's32[1]{0}', space=sflag, size = 0x4, scoped, tag = 'scoped memory for tpu_custom_call.1']
    #allocation7 [shape = 'u8[8192]{0}', space=vmem, size = 0x2000, scoped, tag = 'output window, operand 0, single buffered']
    %7 = vsyncpa [#allocation3], 0
    %8 = vsyncpa [#allocation6], 0
    %9 = vsyncpa [#allocation4], 0
    // Predicated region
    $region2: #{tpu_custom_call.1} parent=1 // pred_check
      _
    $region3: #{tpu_custom_call.1} parent=1 // pred_check_branch
      %11 = sbr.rel (0) target = $region5
    $region4: #{tpu_custom_call.1} parent=1 // pred_region
      %s13 = ssub.s32 16, 16
      %14 = vsyncadd [#allocation3], %s13
      %s16 = sshll.u32 [#allocation2], 4
      %s17 = int_to_ptr.vmem [resolvable:$true] %s16
      %19 = dma.hbm_to_vmem [thread:$0]  %s0, 16, %s17, [#allocation3]
    $region5: #{tpu_custom_call.1} parent=1 // pred_fallthru
      _
    // Predicated region
    $region6: #{tpu_custom_call.1} parent=1 // pred_check
      _
    $region7: #{tpu_custom_call.1} parent=1 // pred_check_branch
      %21 = sbr.rel (0) target = $region9
    $region8: #{tpu_custom_call.1} parent=1 // pred_region
      %s23 = ssub.s32 128, 128
      %24 = vsyncadd [#allocation6], %s23
      %s26 = sshll.u32 [#allocation5], 4
      %s27 = int_to_ptr.vmem [resolvable:$true] %s26
      %29 = dma.hbm_to_vmem [thread:$0]  %s1, 128, %s27, [#allocation6]
    $region9: #{tpu_custom_call.1} parent=1 // pred_fallthru
      _
    // Predicated region
    $region10: #{tpu_custom_call.1} parent=1 // pred_check
      _
    $region11: #{tpu_custom_call.1} parent=1 // pred_check_branch
      %31 = sbr.rel (0) target = $region13
    $region12: #{tpu_custom_call.1} parent=1 // pred_region
      %32 = dma.done [#allocation3], 16
    $region13: #{tpu_custom_call.1} parent=1 // pred_fallthru
      _
    // Predicated region
    $region14: #{tpu_custom_call.1} parent=1 // pred_check
      _
    $region15: #{tpu_custom_call.1} parent=1 // pred_check_branch
      %34 = sbr.rel (0) target = $region17
    $region16: #{tpu_custom_call.1} parent=1 // pred_region
      %35 = dma.done [#allocation6], 128
    $region17: #{tpu_custom_call.1} parent=1 // pred_fallthru
      _
    %v36 = vld [vmem:[#allocation5] sm:$0xff]
    %38 = vrot.lane.b32.xlu0 %v36, 16
    %v39 = vpop.permute.xlu0 %38
    %41 = vrot.lane.b32.xlu0 %v36, 32
    %v42 = vpop.permute.xlu0 %41
    %44 = vrot.lane.b32.xlu0 %v36, 48
    %v45 = vpop.permute.xlu0 %44
    %vm47 = vcmask 130048
    %v48 = vsel %vm47, %v36, %v39
    %vm49 = vcmask 261120
    %v50 = vsel %vm49, %v48, %v42
    %vm51 = vcmask 392192
    %v52 = vsel %vm51, %v50, %v45
    %v53 = vld [vmem:[#allocation2] sm:$0x1]
    %v55 = vlaneseq
    %v56 = vshrl.u32 %v55, 7
    %v57 = vsub.s32 0, %v56
    %v58 = vrot.slane %v53, %v57
    %v60 = vmul.f32 %v52, %v58
    %v61 = vand.u32 2147483647, %v60
    %vm62 = vcmp.le.f32.partialorder %v61, 0.7853982
    %vm63 = vcmp.lt.s32.totalorder %v60, 0
    %v64 = vand.u32 %v60, 2139095040
    %v65 = vshrl.u32 %v64, 23
    %v66 = vsub.s32 %v65, 127
    %v67 = vand.u32 2147483647, %v60
    %v68 = vand.u32 %v67, 8388607
    %v69 = vor.u32 %v68, 8388608
    %v70 = vsub.s32 0, %v69
    %v71 = vadd.s32 %v66, 1
    %vm72 = vcmp.gt.s32.totalorder %v71, 0
    %v73 = vsel %vm72, %v71, 0
    %v74 = vshrl.u32 %v73, 5
    %v75 = vand.u32 %v73, 31
    %v76 = vsub.s32 32, %v75
    %v77 = vshrl.u32 683565275, %v76
    %v78 = vshll.u32 683565275, %v75
    %v79 = vshrl.u32 2475754826, %v76
    %v80 = vor.u32 %v78, %v79
    %v81 = vshll.u32 2475754826, %v75
    %v82 = vshrl.u32 2131351028, %v76
    %v83 = vor.u32 %v81, %v82
    %v84 = vshll.u32 2131351028, %v75
    %v85 = vshrl.u32 2102212464, %v76
    %v86 = vor.u32 %v84, %v85
    %v87 = vshll.u32 2102212464, %v75
    %v88 = vshrl.u32 920167782, %v76
    %v89 = vor.u32 %v87, %v88
    %v90 = vshll.u32 920167782, %v75
    %v91 = vshrl.u32 1326507024, %v76
    %v92 = vor.u32 %v90, %v91
    %vm93 = vcmp.lt.s32.totalorder %v74, 1
    %vm94 = vcmp.lt.s32.totalorder %v74, 2
    %vm95 = vcmp.lt.s32.totalorder %v74, 3
    %vm96 = vcmp.lt.s32.totalorder %v74, 4
    %v97 = vsel %vm93, %v77, %v80
    %v98 = vsel %vm96, %v86, 2102212464
    %v99 = vsel %vm95, %v83, %v98
    %v100 = vsel %vm94, %v97, %v99
    %v101 = vsel %vm93, %v80, %v83
    %v102 = vsel %vm96, %v89, 920167782
    %v103 = vsel %vm95, %v86, %v102
    %v104 = vsel %vm94, %v101, %v103
    %v105 = vsel %vm93, %v83, %v86
    %v106 = vsel %vm96, %v92, 1326507024
    %v107 = vsel %vm95, %v89, %v106
    %v108 = vsel %vm94, %v105, %v107
    %v109 = vshll.u32 %v69, 8
    %v110 = vmul.u32.u64.compose %v109, %v108
    %v111 = vextract.low.u32 %v110
    %v112 = vextract.high.u32 %v110
    %v113 = vmul.u32.u64.compose %v109, %v104
    %v114 = vextract.low.u32 %v113
    %v115 = vextract.high.u32 %v113
    %v116 = vmul.u32 %v109, %v100
    %v117 = vadd.s32 %v112, %v114
    %vm118 = vc.u32 %v112, %v114
    %v119 = vadd.s32 %v115, 1
    %v120 = vsel %vm118, %v119, %v115
    %v121 = vadd.s32 %v116, %v120
    %v122 = vadd.s32 %v121, 536870912
    %v123 = vshrl.u32 %v122, 30
    %v124 = vshll.u32 %v123, 30
    %v125 = vsub.s32 %v121, %v124
    %vm126 = vcmp.lt.s32.totalorder %v125, 0
    %v127 = vsub.s32 0, %v125
    %v128 = vsel %vm126, %v127, %v125
    %v129 = vclz %v128
    %v130 = vsub.s32 %v129, 2
    %vm131 = vcmp.gt.s32.totalorder 0, %v130
    %v132 = vsel %vm131, 0, %v130
    %v133 = vsub.s32 32, %v132
    %v134 = vshll.u32 %v125, %v132
    %v135 = vshrl.u32 %v117, %v133
    %v136 = vor.u32 %v134, %v135
    %v137 = vsub.s32 4294967266, %v132
    %v138 = vadd.s32 %v137, 127
    %v139 = vshll.u32 %v138, 23
    %v140 = vor.u32 4788187, %v139
    %v141 = vand.u32 2147483647, %v140
    %v143 = vcvt.s32.f32 %v136
    %v144 = vmul.f32 %v143, %v141
    %v145 = vxor.u32 %v144, 2147483648
    %v146 = vsel %vm63, %v145, %v144
    %v147 = vsub.s32 4, %v123
    %v148 = vsel %vm63, %v147, %v123
    %v149 = vsel %vm62, %v60, %v146
    %v150 = vsel %vm62, 0, %v148
    %v151 = vcosq.f32.pop %v149
    %v152 = vsinq.f32.pop %v149
    %vm153 = vweird.f32 %v60
    %v154 = vadd.s32 %v150, 3
    %v155 = vand.u32 %v154, 3
    %vm156 = vcmp.lt.s32.totalorder %v155, 2
    %vm157 = vcmp.eq.s32.totalorder %v155, 0
    %v158 = vxor.u32 %v152, 2147483648
    %v159 = vsel %vm157, %v151, %v158
    %vm160 = vcmp.eq.s32.totalorder %v155, 2
    %v161 = vxor.u32 %v151, 2147483648
    %v162 = vsel %vm160, %v161, %v152
    %v163 = vsel %vm156, %v159, %v162
    %v164 = vsel %vm153, nan, %v163
    %vm165 = vcmask 523264
    %166 = vst.msk [vmem:[#allocation7] sm:$0xff] %vm165, %v164
    %v167 = vand.u32 2147483647, %v60
    %vm168 = vcmp.le.f32.partialorder %v167, 0.7853982
    %vm169 = vcmp.lt.s32.totalorder %v60, 0
    %v170 = vand.u32 %v60, 2139095040
    %v171 = vshrl.u32 %v170, 23
    %v172 = vsub.s32 %v171, 127
    %v173 = vand.u32 2147483647, %v60
    %v174 = vand.u32 %v173, 8388607
    %v175 = vor.u32 %v174, 8388608
    %v176 = vsub.s32 0, %v175
    %v177 = vadd.s32 %v172, 1
    %vm178 = vcmp.gt.s32.totalorder %v177, 0
    %v179 = vsel %vm178, %v177, 0
    %v180 = vshrl.u32 %v179, 5
    %v181 = vand.u32 %v179, 31
    %v182 = vsub.s32 32, %v181
    %v183 = vshrl.u32 683565275, %v182
    %v184 = vshll.u32 683565275, %v181
    %v185 = vshrl.u32 2475754826, %v182
    %v186 = vor.u32 %v184, %v185
    %v187 = vshll.u32 2475754826, %v181
    %v188 = vshrl.u32 2131351028, %v182
    %v189 = vor.u32 %v187, %v188
    %v190 = vshll.u32 2131351028, %v181
    %v191 = vshrl.u32 2102212464, %v182
    %v192 = vor.u32 %v190, %v191
    %v193 = vshll.u32 2102212464, %v181
    %v194 = vshrl.u32 920167782, %v182
    %v195 = vor.u32 %v193, %v194
    %v196 = vshll.u32 920167782, %v181
    %v197 = vshrl.u32 1326507024, %v182
    %v198 = vor.u32 %v196, %v197
    %vm199 = vcmp.lt.s32.totalorder %v180, 1
    %vm200 = vcmp.lt.s32.totalorder %v180, 2
    %vm201 = vcmp.lt.s32.totalorder %v180, 3
    %vm202 = vcmp.lt.s32.totalorder %v180, 4
    %v203 = vsel %vm199, %v183, %v186
    %v204 = vsel %vm202, %v192, 2102212464
    %v205 = vsel %vm201, %v189, %v204
    %v206 = vsel %vm200, %v203, %v205
    %v207 = vsel %vm199, %v186, %v189
    %v208 = vsel %vm202, %v195, 920167782
    %v209 = vsel %vm201, %v192, %v208
    %v210 = vsel %vm200, %v207, %v209
    %v211 = vsel %vm199, %v189, %v192
    %v212 = vsel %vm202, %v198, 1326507024
    %v213 = vsel %vm201, %v195, %v212
    %v214 = vsel %vm200, %v211, %v213
    %v215 = vshll.u32 %v175, 8
    %v216 = vmul.u32.u64.compose %v215, %v214
    %v217 = vextract.low.u32 %v216
    %v218 = vextract.high.u32 %v216
    %v219 = vmul.u32.u64.compose %v215, %v210
    %v220 = vextract.low.u32 %v219
    %v221 = vextract.high.u32 %v219
    %v222 = vmul.u32 %v215, %v206
    %v223 = vadd.s32 %v218, %v220
    %vm224 = vc.u32 %v218, %v220
    %v225 = vadd.s32 %v221, 1
    %v226 = vsel %vm224, %v225, %v221
    %v227 = vadd.s32 %v222, %v226
    %v228 = vadd.s32 %v227, 536870912
    %v229 = vshrl.u32 %v228, 30
    %v230 = vshll.u32 %v229, 30
    %v231 = vsub.s32 %v227, %v230
    %vm232 = vcmp.lt.s32.totalorder %v231, 0
    %v233 = vsub.s32 0, %v231
    %v234 = vsel %vm232, %v233, %v231
    %v235 = vclz %v234
    %v236 = vsub.s32 %v235, 2
    %vm237 = vcmp.gt.s32.totalorder 0, %v236
    %v238 = vsel %vm237, 0, %v236
    %v239 = vsub.s32 32, %v238
    %v240 = vshll.u32 %v231, %v238
    %v241 = vshrl.u32 %v223, %v239
    %v242 = vor.u32 %v240, %v241
    %v243 = vsub.s32 4294967266, %v238
    %v244 = vadd.s32 %v243, 127
    %v245 = vshll.u32 %v244, 23
    %v246 = vor.u32 4788187, %v245
    %v247 = vand.u32 2147483647, %v246
    %v249 = vcvt.s32.f32 %v242
    %v250 = vmul.f32 %v249, %v247
    %v251 = vxor.u32 %v250, 2147483648
    %v252 = vsel %vm169, %v251, %v250
    %v253 = vsub.s32 4, %v229
    %v254 = vsel %vm169, %v253, %v229
    %v255 = vsel %vm168, %v60, %v252
    %v256 = vsel %vm168, 0, %v254
    %v257 = vcosq.f32.pop %v255
    %v258 = vsinq.f32.pop %v255
    %vm259 = vweird.f32 %v60
    %v260 = vand.u32 %v256, 3
    %vm261 = vcmp.lt.s32.totalorder %v260, 2
    %vm262 = vcmp.eq.s32.totalorder %v260, 0
    %v263 = vxor.u32 %v258, 2147483648
    %v264 = vsel %vm262, %v257, %v263
    %vm265 = vcmp.eq.s32.totalorder %v260, 2
    %v266 = vxor.u32 %v257, 2147483648
    %v267 = vsel %vm265, %v266, %v258
    %v268 = vsel %vm261, %v264, %v267
    %v269 = vsel %vm259, nan, %v268
    %271 = vrot.lane.b32.xlu0 %v269, 64
    %v272 = vpop.permute.xlu0 %271
    %vm274 = vcmask 1048064
    %275 = vst.msk [vmem:[#allocation7] sm:$0xff] %vm274, %v272
    %276 = vst.msk [vmem:[#allocation7 + $0x8] sm:$0xff] %vm47, %v36
    // Predicated region
    $region18: #{tpu_custom_call.1} parent=1 // pred_check
      _
    $region19: #{tpu_custom_call.1} parent=1 // pred_check_branch
      %278 = sbr.rel (0) target = $region21
    $region20: #{tpu_custom_call.1} parent=1 // pred_region
      %s280 = ssub.s32 256, 256
      %281 = vsyncadd [#allocation4], %s280
      %s283 = sshll.u32 [#allocation7], 4
      %s284 = int_to_ptr.vmem [resolvable:$true] %s283
      %286 = dma.vmem_to_hbm [thread:$0]  %s284, 256, %s2, [#allocation4]
    $region21: #{tpu_custom_call.1} parent=1 // pred_fallthru
      _
    // Predicated region
    $region22: #{tpu_custom_call.1} parent=1 // pred_check
      _
    $region23: #{tpu_custom_call.1} parent=1 // pred_check_branch
      %288 = sbr.rel (0) target = $region25
    $region24: #{tpu_custom_call.1} parent=1 // pred_region
      %289 = dma.done [#allocation4], 256
    $region25: #{tpu_custom_call.1} parent=1 // pred_fallthru
      _
    %290 = vsyncpa [#allocation3], 1
    %291 = vsyncpa [#allocation6], 1
    %292 = vsyncpa [#allocation4], 1

</llo_original>
